<compile_context>
chip_gen: v7x
topology: tpu7x:2x2x1
jax: 0.10.0
libtpu: 0.0.40
codegen_flags: <defaults>
</compile_context>

<pallas_src>
import math

import jax
import jax.numpy as jnp
from jax import lax
from jax.experimental import pallas as pl
from jax.experimental.pallas import tpu as pltpu

_VMEM_LIMIT = 48 << 20     # fits v7x's 64 MiB/TC, lifts v5e's 16 MiB scoped default
_BLOCK_BUDGET = 8 << 20    # target bytes per input block (before double-buffering)


def _round_up(a, b):
    return -(-a // b) * b


def _sublane(dtype):
    # sublane packing: 8 rows for 4-byte, 16 for 2-byte, 32 for 1-byte dtypes
    return {4: 8, 2: 16, 1: 32}.get(jnp.dtype(dtype).itemsize, 8)


def _lane_tile(n, cap):
    """Lane (minor-dim) tile: a multiple of 128, or the full dim."""
    cap = max(128, (cap // 128) * 128)
    if n % 128 == 0:
        return min(cap, n)
    if n <= cap:
        return n          # full dim is always legal, even if unaligned
    return cap


def _sub_tile(n, sub, cap):
    """Sublane (second-minor) tile: a multiple of `sub` (>= 8), or the full dim."""
    cap = max(sub, (cap // sub) * sub)
    if n % sub == 0:
        return min(cap, n)
    if n <= cap:
        return n
    return cap


# ---------------------------------------------------------------------------
# Kernel 1: sum over axis 1 of (P, K, M)  ->  (P, M)        [no transpose]
# ---------------------------------------------------------------------------
def _make_middle_kernel(K, tk, need_mask):
    def kernel(x_ref, o_ref):
        k = pl.program_id(2)

        @pl.when(k == 0)
        def _():
            o_ref[...] = jnp.zeros(o_ref.shape, o_ref.dtype)

        x = x_ref[...].astype(jnp.float32)
        if need_mask:  # trace-time: only emitted when the K tiling is ragged
            kidx = k * tk + lax.broadcasted_iota(jnp.int32, x.shape, 1)
            x = jnp.where(kidx < K, x, 0.0)
        o_ref[...] += jnp.sum(x, axis=1)

    return kernel


def _reduce_middle(x3, *, lane_cap=2048, sub_cap=1024, p_cap=256,
                   budget=_BLOCK_BUDGET):
    """x3: (P, K, M) -> (P, M) float32, summing over axis 1."""
    P, K, M = x3.shape
    itemsize = jnp.dtype(x3.dtype).itemsize
    sub = _sublane(x3.dtype)

    # P-tile of the output must be a multiple of 8 (sublane dim) unless full.
    tp_min = P if P <= 8 else 8
    inner_budget = max(budget // tp_min, 128 * sub * itemsize)

    # Grow the lane (contiguous) dim first, then the reduction (sublane) dim.
    tm = _lane_tile(M, lane_cap)
    if P == 1 and pl.cdiv(M, tm) == 1 and tm % 256 == 0:
        tm //= 2          # two lane tiles -> both v7x TensorCores get work
    tk_cap = min(sub_cap, max(sub, (inner_budget // (tm * itemsize) // sub) * sub))
    tk = _sub_tile(K, sub, tk_cap)

    blk = tk * tm * itemsize
    tp = min(P, p_cap, max(1, budget // blk))
    if tp < P:
        tp = max(tp_min, (tp // 8) * 8)

    grid = (pl.cdiv(P, tp), pl.cdiv(M, tm), pl.cdiv(K, tk))
    need_mask = (K % tk) != 0

    return pl.pallas_call(
        _make_middle_kernel(K, tk, need_mask),
        out_shape=jax.ShapeDtypeStruct((P, M), jnp.float32),
        grid_spec=pltpu.PrefetchScalarGridSpec(
            num_scalar_prefetch=0,
            grid=grid,
            in_specs=[pl.BlockSpec((tp, tk, tm), lambda p, i, k: (p, k, i))],
            out_specs=pl.BlockSpec((tp, tm), lambda p, i, k: (p, i)),
        ),
        compiler_params=pltpu.CompilerParams(
            dimension_semantics=("parallel", "parallel", "arbitrary"),
            vmem_limit_bytes=_VMEM_LIMIT),
    )(x3)


# ---------------------------------------------------------------------------
# Kernel 2: sum over the trailing axis of (M, K)  ->  (M,)   [no transpose]
# ---------------------------------------------------------------------------
def _make_last_kernel(K, tk, need_mask):
    def kernel(x_ref, o_ref):
        k = pl.program_id(1)

        @pl.when(k == 0)
        def _():
            o_ref[...] = jnp.zeros(o_ref.shape, o_ref.dtype)

        x = x_ref[...].astype(jnp.float32)
        if need_mask:  # trace-time: only emitted when the K tiling is ragged
            cidx = k * tk + lax.broadcasted_iota(jnp.int32, x.shape, 1)
            x = jnp.where(cidx < K, x, 0.0)
        o_ref[...] += jnp.sum(x, axis=-1, keepdims=True)

    return kernel


def _reduce_last(x2, *, lane_cap=4096, row_cap=1024, budget=_BLOCK_BUDGET):
    """x2: (M, K) -> (M,) float32, summing over the trailing (lane) axis."""
    M, K = x2.shape
    itemsize = jnp.dtype(x2.dtype).itemsize
    sub = _sublane(x2.dtype)

    # Reduction dim K is the contiguous/lane dim here: grow it first.
    tm0 = _sub_tile(M, sub, min(row_cap, sub * 16))      # provisional row tile
    tk = _lane_tile(K, min(lane_cap, max(128, budget // (tm0 * itemsize))))
    tm = _sub_tile(M, sub,
                   min(row_cap, max(sub, (budget // (tk * itemsize) // sub) * sub)))

    grid = (pl.cdiv(M, tm), pl.cdiv(K, tk))
    need_mask = (K % tk) != 0

    out = pl.pallas_call(
        _make_last_kernel(K, tk, need_mask),
        out_shape=jax.ShapeDtypeStruct((M, 1), jnp.float32),
        grid_spec=pltpu.PrefetchScalarGridSpec(
            num_scalar_prefetch=0,
            grid=grid,
            in_specs=[pl.BlockSpec((tm, tk), lambda i, k: (i, k))],
            out_specs=pl.BlockSpec((tm, 1), lambda i, k: (i, 0)),
        ),
        compiler_params=pltpu.CompilerParams(
            dimension_semantics=("parallel", "arbitrary"),
            vmem_limit_bytes=_VMEM_LIMIT),
    )(x2)
    return out[:, 0]


# ---------------------------------------------------------------------------
# Full reduction (dim=None) via _reduce_middle on a (1, rows, lane) view.
# ---------------------------------------------------------------------------
def _sum_all(x):
    flat = x.reshape(-1)
    n = int(flat.shape[0])
    lane = None
    for want_rows in (8, 1):                      # prefer >= 8 rows of work
        for cand in (2048, 1024, 512, 256, 128):
            if n >= cand * want_rows and n % cand == 0:
                lane = cand
                break
        if lane is not None:
            break
    if lane is None:
        # n is not a multiple of 128 (or n < 128): zero-pad the tail.
        # TODO(synk): only remaining HBM pad copy; zeros are neutral for sum.
        lane = 128
        n_pad = _round_up(max(n, 1), lane)
        flat = jnp.pad(flat, (0, n_pad - n))
        n = n_pad
    rows = n // lane
    partial = _reduce_middle(flat.reshape(1, rows, lane))   # (1, lane) f32
    # Final combine of <= 2048 lane partials; tiny, done outside the kernel.
    return jnp.sum(partial)


# ---------------------------------------------------------------------------
# Public wrapper: matches Summation.forward -> torch.sum(x, dim=self.dim)
# ---------------------------------------------------------------------------
def summation(x, dim=None):
    out_dtype = x.dtype
    if dim is None:
        return _sum_all(x).astype(out_dtype)

    dims = (dim,) if isinstance(dim, int) else tuple(dim)
    dims = tuple(sorted({d % x.ndim for d in dims}))
    if not dims:
        return x

    if dims != tuple(range(dims[0], dims[-1] + 1)):
        # Non-contiguous reduced dims: single transposing copy, then prefix path.
        x = jnp.moveaxis(x, dims, tuple(range(len(dims))))
        dims = tuple(range(len(dims)))

    shape = x.shape
    d0, d1 = dims[0], dims[-1]
    pre = math.prod(shape[:d0])
    red = math.prod(shape[d0:d1 + 1])
    post = math.prod(shape[d1 + 1:])
    out_shape = shape[:d0] + shape[d1 + 1:]

    if pre == 1 and post == 1:
        res = _sum_all(x)                                   # full reduction
    elif post == 1:
        res = _reduce_last(x.reshape(pre, red))             # trailing dims
    else:
        res = _reduce_middle(x.reshape(pre, red, post))     # leading/middle dims

    return res.reshape(out_shape).astype(out_dtype)


if __name__ == "__main__":
    key = jax.random.PRNGKey(0)
    B, C, H, W = 2, 4, 16, 16
    x = jax.random.normal(key, (B, C, H, W), dtype=jnp.float32)

    cases = [
        (1, lambda: jnp.sum(x, axis=1)),
        (-1, lambda: jnp.sum(x, axis=-1)),
        (0, lambda: jnp.sum(x, axis=0)),
        ((2, 3), lambda: jnp.sum(x, axis=(2, 3))),
        ((0, 2), lambda: jnp.sum(x, axis=(0, 2))),   # non-contiguous fallback
        (None, lambda: jnp.sum(x)),
    ]
    for d, ref_fn in cases:
        out = jax.block_until_ready(summation(x, dim=d))
        ref = ref_fn()
        assert out.shape == ref.shape, f"shape mismatch for dim={d}"
        assert jnp.allclose(out, ref, atol=1e-3, rtol=1e-3), f"value mismatch dim={d}"

    # Ragged shapes: exercise the in-kernel tail masking (K % tile != 0).
    k1, k2 = jax.random.split(jax.random.PRNGKey(1))
    y = jax.random.normal(k1, (2, 1030, 256), dtype=jnp.float32)
    oy = jax.block_until_ready(summation(y, dim=1))
    ry = jnp.sum(y, axis=1)
    assert oy.shape == ry.shape and jnp.allclose(oy, ry, atol=1e-3, rtol=1e-3), \
        "value mismatch ragged middle"

    z = jax.random.normal(k2, (16, 5000), dtype=jnp.float32)
    oz = jax.block_until_ready(summation(z, dim=-1))
    rz = jnp.sum(z, axis=-1)
    assert oz.shape == rz.shape and jnp.allclose(oz, rz, atol=1e-3, rtol=1e-3), \
        "value mismatch ragged last"

    print("KERNEL_OK")
</pallas_src>

<mosaic_0001>
module attributes {stable_mosaic.version = 11 : i64} {
  func.func @kernel(%arg0: i32, %arg1: i32, %arg2: i32, %arg3: memref<2x4x256xf32, #tpu.memory_space<vmem>>, %arg4: memref<2x256xf32, #tpu.memory_space<vmem>>) attributes {dimension_semantics = [#tpu.dimension_semantics<parallel>, #tpu.dimension_semantics<parallel>, #tpu.dimension_semantics<arbitrary>], iteration_bounds = array<i64: 1, 1, 1>, scalar_prefetch = 0 : i64, scratch_operands = 0 : i64, tpu.core_type = #tpu.core_type<tc>, window_params = [{transform_indices = @transform_0, window_bounds = array<i64: 2, 4, 256>}, {transform_indices = @transform_1, window_bounds = array<i64: 2, 256>}]} {
    %c0_i32 = arith.constant 0 : i32
    %0 = arith.cmpi eq, %arg2, %c0_i32 : i32
    %1 = arith.extui %0 : i1 to i32
    %c0_i32_0 = arith.constant 0 : i32
    %2 = arith.cmpi ne, %1, %c0_i32_0 : i32
    scf.if %2 {
      %cst_7 = arith.constant 0.000000e+00 : f32
      %8 = vector.broadcast %cst_7 : f32 to vector<2x256xf32>
      %c0_8 = arith.constant 0 : index
      %c0_9 = arith.constant 0 : index
      %9 = vector.load %arg4[%c0_8, %c0_9] : memref<2x256xf32, #tpu.memory_space<vmem>>, vector<2x256xf32>
      tpu.vector_store %arg4[%c0_8, %c0_9], %8 {strides = array<i32>} : memref<2x256xf32, #tpu.memory_space<vmem>>, vector<2x256xf32>,
    } else {
    }
    %c0 = arith.constant 0 : index
    %c0_1 = arith.constant 0 : index
    %c0_2 = arith.constant 0 : index
    %3 = vector.load %arg3[%c0, %c0_1, %c0_2] : memref<2x4x256xf32, #tpu.memory_space<vmem>>, vector<2x4x256xf32>
    %c0_3 = arith.constant 0 : index
    %c0_4 = arith.constant 0 : index
    %4 = vector.load %arg4[%c0_3, %c0_4] : memref<2x256xf32, #tpu.memory_space<vmem>>, vector<2x256xf32>
    %cst = arith.constant dense<0.000000e+00> : vector<2x256xf32>
    %5 = vector.multi_reduction <add>, %3, %cst [1] : vector<2x4x256xf32> to vector<2x256xf32>
    %6 = arith.addf %4, %5 : vector<2x256xf32>
    %c0_5 = arith.constant 0 : index
    %c0_6 = arith.constant 0 : index
    %7 = vector.load %arg4[%c0_5, %c0_6] : memref<2x256xf32, #tpu.memory_space<vmem>>, vector<2x256xf32>
    tpu.vector_store %arg4[%c0_5, %c0_6], %6 {strides = array<i32>} : memref<2x256xf32, #tpu.memory_space<vmem>>, vector<2x256xf32>,
    return
  }
  func.func @transform_0(%arg0: i32, %arg1: i32, %arg2: i32) -> (i32, i32, i32) {
    %c0_i32 = arith.constant 0 : i32
    return %arg0, %arg2, %arg1 : i32, i32, i32
  }
  func.func @transform_1(%arg0: i32, %arg1: i32, %arg2: i32) -> (i32, i32) {
    %c0_i32 = arith.constant 0 : i32
    return %arg0, %arg1 : i32, i32
  }
}

</mosaic_0001>

<llo_original>
// kernel: tpu_custom_call.1
$region0: #{tpu_custom_call.1}
  #allocation0 [shape = 'u32[]', space=smem, size = 0x4, offset = 0x4, fixed_abs, tag = 'smem constant byte address 0x4 - core index']
  #allocation1 [shape = 'u32[144,128]{1,0:T(1,128)}', space=vmem, size = 0x12000, scoped, tag = 'internal scratch']
  %s0 = inlined_call_operand.hbm [shape: f32[2,4,256], index: 0, kind: input, shape index: {}]
  %s1 = inlined_call_operand.hbm [shape: f32[2,256], index: 1, kind: output, shape index: {}]
  %s2 = sld [smem:[#allocation0]]
  $region22: #{tpu_custom_call.1} parent=0
    _
  %s4 = ssub.s32 1, %s2
  %s5 = scalar_select 0, %s4, %s2
  $region1: #{tpu_custom_call.1} parent=0
    #allocation2 [shape = 'u8[8192]{0}', space=vmem, size = 0x2000, scoped, tag = 'input window, operand 0, single buffered']
    #allocation3 [shape = 's32[1]{0}', space=sflag, size = 0x4, scoped, tag = 'scoped memory for tpu_custom_call.1']
    #allocation4 [shape = 's32[1]{0}', space=sflag, size = 0x4, scoped, tag = 'scoped memory for tpu_custom_call.1']
    #allocation5 [shape = 'u8[2048]{0}', space=vmem, size = 0x800, scoped, tag = 'output window, operand 0, single buffered']
    %6 = vsyncpa [#allocation3], 0
    %7 = vsyncpa [#allocation4], 0
    // Predicated region
    $region2: #{tpu_custom_call.1} parent=1 // pred_check
      _
    $region3: #{tpu_custom_call.1} parent=1 // pred_check_branch
      %9 = sbr.rel (0) target = $region5
    $region4: #{tpu_custom_call.1} parent=1 // pred_region
      %s11 = ssub.s32 256, 256
      %12 = vsyncadd [#allocation3], %s11
      %s13 = sshll.u32 [#allocation2], 4
      %s14 = int_to_ptr.vmem [resolvable:$true] %s13
      %19 = dma.hbm_to_vmem [thread:$0]  %s0, 256, %s14, [#allocation3], 128, 128, 8
    $region5: #{tpu_custom_call.1} parent=1 // pred_fallthru
      _
    // Predicated region
    $region6: #{tpu_custom_call.1} parent=1 // pred_check
      _
    $region7: #{tpu_custom_call.1} parent=1 // pred_check_branch
      %21 = sbr.rel (0) target = $region9
    $region8: #{tpu_custom_call.1} parent=1 // pred_region
      %22 = dma.done [#allocation3], 256
    $region9: #{tpu_custom_call.1} parent=1 // pred_fallthru
      _
    %p23 = scmp.eq.s32.totalorder 0, 0
    // Predicated region
    $region10: #{tpu_custom_call.1} parent=1 // pred_check
      %p24 = pneg %p23
    $region11: #{tpu_custom_call.1} parent=1 // pred_check_branch
      %26 = sbr.rel (%p24) target = $region13
    $region12: #{tpu_custom_call.1} parent=1 // pred_region
      %27 = vst [vmem:[#allocation5] sm:$0xf] 0.0
    $region13: #{tpu_custom_call.1} parent=1 // pred_fallthru
      _
    %v28 = vld [vmem:[#allocation2] sm:$0xff]
    %v29 = vld [vmem:[#allocation2 + $0x8] sm:$0xff]
    %v30 = vld [vmem:[#allocation5] sm:$0xf]
    %v33 = vcombine.high %v28, %v28
    %v34 = vcombine.high %v29, %v29
    %vm37 = vcmask 1043456
    %v38 = vsel %vm37, %v28, 0.0
    %v39 = vrot.slane %v38, 4
    %v40 = vadd.f32 %v38, %v39
    %v41 = vrot.slane %v40, 2
    %v42 = vadd.f32 %v40, %v41
    %v43 = vrot.slane %v42, 1
    %v44 = vadd.f32 %v42, %v43
    %v45 = vsel %vm37, %v33, 0.0
    %v46 = vrot.slane %v45, 4
    %v47 = vadd.f32 %v45, %v46
    %v48 = vrot.slane %v47, 2
    %v49 = vadd.f32 %v47, %v48
    %v50 = vrot.slane %v49, 1
    %v51 = vadd.f32 %v49, %v50
    %v52 = vsel %vm37, %v29, 0.0
    %v53 = vrot.slane %v52, 4
    %v54 = vadd.f32 %v52, %v53
    %v55 = vrot.slane %v54, 2
    %v56 = vadd.f32 %v54, %v55
    %v57 = vrot.slane %v56, 1
    %v58 = vadd.f32 %v56, %v57
    %v59 = vsel %vm37, %v34, 0.0
    %v60 = vrot.slane %v59, 4
    %v61 = vadd.f32 %v59, %v60
    %v62 = vrot.slane %v61, 2
    %v63 = vadd.f32 %v61, %v62
    %v64 = vrot.slane %v63, 1
    %v65 = vadd.f32 %v63, %v64
    %v70 = vcombine.low %v44, %v51
    %v72 = vunpack.c.l.s4 1983009808
    %v73 = vunpack.c.0.s8 %v72
    %v74 = vlaneseq
    %v75 = vshrl.u32 %v74, 7
    %v76 = vsub.s32 %v73, %v75
    %v77 = vrot.slane %v70, %v76
    %v78 = vcombine.low %v58, %v65
    %v80 = vunpack.c.l.s4 1983009808
    %v81 = vunpack.c.0.s8 %v80
    %v82 = vlaneseq
    %v83 = vshrl.u32 %v82, 7
    %v84 = vsub.s32 %v81, %v83
    %v85 = vrot.slane %v78, %v84
    %vm86 = vcmask 1044484
    %v87 = vsel %vm86, %v77, %v77
    %vm88 = vcmask 1046534
    %v89 = vsel %vm88, %v77, %v87
    %v90 = vrot.slane %v85, 7
    %vm91 = vcmask 1041409
    %v92 = vsel %vm91, %v90, %v89
    %vm93 = vcmask 1043459
    %v94 = vsel %vm93, %v90, %v92
    %vm95 = vcmask 1045509
    %v96 = vsel %vm95, %v90, %v94
    %vm97 = vcmask 1047559
    %v98 = vsel %vm97, %v90, %v96
    %v100 = vadd.f32 %v30, %v98
    %101 = vst [vmem:[#allocation5] sm:$0xf] %v100
    // Predicated region
    $region14: #{tpu_custom_call.1} parent=1 // pred_check
      _
    $region15: #{tpu_custom_call.1} parent=1 // pred_check_branch
      %103 = sbr.rel (0) target = $region17
    $region16: #{tpu_custom_call.1} parent=1 // pred_region
      %s105 = ssub.s32 64, 64
      %106 = vsyncadd [#allocation4], %s105
      %s108 = sshll.u32 [#allocation5], 4
      %s109 = int_to_ptr.vmem [resolvable:$true] %s108
      %111 = dma.vmem_to_hbm [thread:$0]  %s109, 64, %s1, [#allocation4]
    $region17: #{tpu_custom_call.1} parent=1 // pred_fallthru
      _
    // Predicated region
    $region18: #{tpu_custom_call.1} parent=1 // pred_check
      _
    $region19: #{tpu_custom_call.1} parent=1 // pred_check_branch
      %113 = sbr.rel (0) target = $region21
    $region20: #{tpu_custom_call.1} parent=1 // pred_region
      %114 = dma.done [#allocation4], 64
    $region21: #{tpu_custom_call.1} parent=1 // pred_fallthru
      _
    %115 = vsyncpa [#allocation3], 1
    %116 = vsyncpa [#allocation4], 1

</llo_original>
